<compile_context>
chip_gen: v6e
topology: v6e:2x2x1
jax: 0.10.0
libtpu: 0.0.40
codegen_flags: <defaults>
</compile_context>

<pallas_src>
import math

import jax
import jax.numpy as jnp
from jax.experimental import pallas as pl
from jax.experimental.pallas import tpu as pltpu


def _dp_main_kernel(
    x_ref, mask_ref,
    gamma_ref, beta_ref,
    w1_ref, b1_ref,
    w2_ref, b2_ref,
    wl_ref, bl_ref,
    base_ref, energy_ref,
):
    x = x_ref[...].astype(jnp.float32)                 # (S, D)
    S = x.shape[0]

    # ---- LayerNorm over features (f32, VPU) ----
    mean = jnp.mean(x, axis=-1, keepdims=True)
    var = jnp.mean((x - mean) ** 2, axis=-1, keepdims=True)
    xn = (x - mean) * jax.lax.rsqrt(var + 1e-5)
    xn = xn * gamma_ref[...] + beta_ref[...]           # gamma/beta are (1, D)

    # ---- phoneme_energy = ||xn||_2 along features (lane reduce) ----
    energy = jnp.sqrt(jnp.sum(xn * xn, axis=-1))       # (S,)

    # ---- one pair of boundary masks, reused by BOTH conv layers ----
    row = jax.lax.broadcasted_iota(jnp.int32, (S, 1), 0)
    not_first = (row != 0).astype(jnp.float32)         # zero out t == 0 after +1 shift
    not_last = (row != S - 1).astype(jnp.float32)      # zero out t == S-1 after -1 shift

    def tap_concat(h):
        # [h[t-1], h[t], h[t+1]] concatenated along lanes; zero outside the sequence.
        prev = pltpu.roll(h, shift=1, axis=0) * not_first
        nxt = pltpu.roll(h, shift=S - 1, axis=0) * not_last
        return jnp.concatenate([prev, h, nxt], axis=-1)

    # ---- Conv1 (k=3, pad=1) as ONE fused-K matmul, bf16 operands / f32 accum ----
    h1 = jnp.dot(tap_concat(xn).astype(jnp.bfloat16), w1_ref[...],
                 preferred_element_type=jnp.float32) + b1_ref[...]
    h1 = jnp.maximum(h1, 0.0)
    # TODO(synk): nn.Dropout is identity in eval mode; train-mode dropout not implemented.

    # ---- Conv2 (k=3, pad=1) as ONE fused-K matmul ----
    h2 = jnp.dot(tap_concat(h1).astype(jnp.bfloat16), w2_ref[...],
                 preferred_element_type=jnp.float32) + b2_ref[...]
    h2 = jnp.maximum(h2, 0.0)

    # ---- Linear(F -> 1) on VPU/XLU (MXU with N=1 would be <1% utilized) ----
    base = jnp.sum(h2 * wl_ref[...], axis=-1) + bl_ref[0]      # (S,)

    # ---- masked_fill inside SimpleVariancePredictor.forward ----
    base = jnp.where(mask_ref[...] != 0, 0.0, base.reshape(1, S))

    # lane-dense stores (last dim = S)
    base_ref[...] = base
    energy_ref[...] = energy.reshape(1, S)


def _dp_epilogue_kernel(base_ref, energy_ref, mask_ref, out_ref):
    base = base_ref[...]                                # (B, S) f32
    energy = energy_ref[...]                            # (B, S) f32
    S = base.shape[1]

    # global max over the whole tensor (matches phoneme_energy.max() in the reference)
    emax = jnp.max(energy, keepdims=True)               # (1, 1)
    inv_emax = pl.reciprocal(emax, approx=True)         # EUP slot, ~free
    energy_scale = 0.8 + 0.4 * (energy * inv_emax)

    pos = jax.lax.broadcasted_iota(jnp.int32, (1, S), 1).astype(jnp.float32)
    pos_scale = 1.0 + 0.1 * (pos / float(S))

    out = base * (energy_scale * pos_scale)
    # final masked_fill (kept to preserve the reference's operation order exactly)
    out = jnp.where(mask_ref[...] != 0, 0.0, out)
    out_ref[...] = out


def make_params(key, input_dim, filter_size, kernel_size=3):
    """Deterministic synthetic parameters mirroring the PyTorch module's init."""
    D, F, K = input_dim, filter_size, kernel_size
    k1, k2, k3 = jax.random.split(key, 3)
    # kaiming_normal for conv weights: std = sqrt(2 / fan_in), fan_in = C_in * K
    w1 = jax.random.normal(k1, (K, D, F), jnp.float32) * math.sqrt(2.0 / (D * K))
    w2 = jax.random.normal(k2, (K, F, F), jnp.float32) * math.sqrt(2.0 / (F * K))
    # linear: default torch uniform(-1/sqrt(F), 1/sqrt(F)); bias overridden to 1.5
    bound = 1.0 / math.sqrt(F)
    wl = jax.random.uniform(k3, (F, 1), jnp.float32, minval=-bound, maxval=bound)
    return dict(
        gamma=jnp.ones((1, D), jnp.float32),
        beta=jnp.zeros((1, D), jnp.float32),
        # conv taps stacked along K: rows [0:C)=tap t-1, [C:2C)=tap t, [2C:3C)=tap t+1
        w1=w1.reshape(K * D, F),
        b1=jnp.full((1, F), 0.1, jnp.float32),
        w2=w2.reshape(K * F, F),
        b2=jnp.full((1, F), 0.1, jnp.float32),
        wl=wl,
        bl=jnp.full((1,), 1.5, jnp.float32),
    )


def duration_predictor(x, mask, params):
    B, S, D = x.shape
    F = params["b1"].shape[-1]

    # bf16 matmul operands (f32 accumulation inside the kernel)
    w1 = params["w1"].astype(jnp.bfloat16)              # (3D, F)
    w2 = params["w2"].astype(jnp.bfloat16)              # (3F, F)
    wl_row = params["wl"].reshape(1, F)                 # VPU multiplier, stays f32
    bl = params["bl"].reshape(1)                        # SMEM scalar

    mask_i = mask.astype(jnp.int32)
    mask3 = mask_i.reshape(B, 1, S)

    def const(shape):
        return pl.BlockSpec(shape, lambda b: (0,) * len(shape))

    base, energy = pl.pallas_call(
        _dp_main_kernel,
        grid=(B,),
        out_shape=(jax.ShapeDtypeStruct((B, 1, S), jnp.float32),
                   jax.ShapeDtypeStruct((B, 1, S), jnp.float32)),
        in_specs=[
            pl.BlockSpec((None, S, D), lambda b: (b, 0, 0)),        # x, one sequence per step
            pl.BlockSpec((None, 1, S), lambda b: (b, 0, 0)),        # mask
            const((1, D)), const((1, D)),                           # gamma, beta
            const((3 * D, F)), const((1, F)),                       # fused conv1 W, b1
            const((3 * F, F)), const((1, F)),                       # fused conv2 W, b2
            const((1, F)),                                          # linear weight row
            pl.BlockSpec(memory_space=pltpu.MemorySpace.SMEM),      # linear bias scalar
        ],
        out_specs=(pl.BlockSpec((None, 1, S), lambda b: (b, 0, 0)),
                   pl.BlockSpec((None, 1, S), lambda b: (b, 0, 0))),
        compiler_params=pltpu.CompilerParams(
            dimension_semantics=("parallel",),
            vmem_limit_bytes=48 * 1024 * 1024,
        ),
    )(x, mask3, params["gamma"], params["beta"], w1, params["b1"],
      w2, params["b2"], wl_row, bl)

    # tiny epilogue kernel: global energy max + combined scaling + final mask
    vmem = pl.BlockSpec(memory_space=pltpu.MemorySpace.VMEM)
    out = pl.pallas_call(
        _dp_epilogue_kernel,
        out_shape=jax.ShapeDtypeStruct((B, S), jnp.float32),
        in_specs=[vmem, vmem, vmem],
        out_specs=vmem,
    )(base.reshape(B, S), energy.reshape(B, S), mask_i)

    return out.reshape(B, S, 1)


if __name__ == "__main__":
    B, S, D, F = 2, 16, 32, 64
    key = jax.random.PRNGKey(0)
    kx, kp = jax.random.split(key)

    x = jax.random.normal(kx, (B, S, D), jnp.float32)
    # mask: 1 where the position is padding (masked_fill to zero); last 3 of batch 1
    mask = jnp.zeros((B, S), jnp.int32).at[1, S - 3:].set(1)

    params = make_params(kp, input_dim=D, filter_size=F, kernel_size=3)

    out = duration_predictor(x, mask, params)
    out = jax.block_until_ready(out)
    assert out.shape == (B, S, 1)
    print("KERNEL_OK")
</pallas_src>

<mosaic_0001>
module attributes {stable_mosaic.version = 11 : i64} {
  func.func @_dp_main_kernel(%arg0: i32, %arg1: memref<1x16x32xf32, #tpu.memory_space<vmem>>, %arg2: memref<1x1x16xi32, #tpu.memory_space<vmem>>, %arg3: memref<1x32xf32, #tpu.memory_space<vmem>>, %arg4: memref<1x32xf32, #tpu.memory_space<vmem>>, %arg5: memref<96x64xbf16, #tpu.memory_space<vmem>>, %arg6: memref<1x64xf32, #tpu.memory_space<vmem>>, %arg7: memref<192x64xbf16, #tpu.memory_space<vmem>>, %arg8: memref<1x64xf32, #tpu.memory_space<vmem>>, %arg9: memref<1x64xf32, #tpu.memory_space<vmem>>, %arg10: memref<1xf32, #tpu.memory_space<smem>>, %arg11: memref<1x1x16xf32, #tpu.memory_space<vmem>>, %arg12: memref<1x1x16xf32, #tpu.memory_space<vmem>>) attributes {dimension_semantics = [#tpu.dimension_semantics<parallel>], iteration_bounds = array<i64: 2>, scalar_prefetch = 0 : i64, scratch_operands = 0 : i64, tpu.core_type = #tpu.core_type<tc>, window_params = [{transform_indices = @transform_0, window_bounds = array<i64: 1, 16, 32>}, {transform_indices = @transform_1, window_bounds = array<i64: 1, 1, 16>}, {pipeline_mode = #tpu.pipeline_mode<synchronous>, transform_indices = @transform_2, window_bounds = array<i64: 1, 32>}, {pipeline_mode = #tpu.pipeline_mode<synchronous>, transform_indices = @transform_3, window_bounds = array<i64: 1, 32>}, {pipeline_mode = #tpu.pipeline_mode<synchronous>, transform_indices = @transform_4, window_bounds = array<i64: 96, 64>}, {pipeline_mode = #tpu.pipeline_mode<synchronous>, transform_indices = @transform_5, window_bounds = array<i64: 1, 64>}, {pipeline_mode = #tpu.pipeline_mode<synchronous>, transform_indices = @transform_6, window_bounds = array<i64: 192, 64>}, {pipeline_mode = #tpu.pipeline_mode<synchronous>, transform_indices = @transform_7, window_bounds = array<i64: 1, 64>}, {pipeline_mode = #tpu.pipeline_mode<synchronous>, transform_indices = @transform_8, window_bounds = array<i64: 1, 64>}, {transform_indices = @transform_9, window_bounds = array<i64: 1>}, {transform_indices = @transform_10, window_bounds = array<i64: 1, 1, 16>}, {transform_indices = @transform_11, window_bounds = array<i64: 1, 1, 16>}]} {
    %c0 = arith.constant 0 : index
    %c0_0 = arith.constant 0 : index
    %c0_1 = arith.constant 0 : index
    %0 = vector.load %arg1[%c0, %c0_0, %c0_1] : memref<1x16x32xf32, #tpu.memory_space<vmem>>, vector<1x16x32xf32>
    %1 = vector.shape_cast %0 : vector<1x16x32xf32> to vector<16x32xf32>
    %cst = arith.constant dense<0.000000e+00> : vector<16xf32>
    %2 = vector.multi_reduction <add>, %1, %cst [1] : vector<16x32xf32> to vector<16xf32>
    %3 = vector.shape_cast %2 : vector<16xf32> to vector<16x1xf32>
    %cst_2 = arith.constant 3.200000e+01 : f32
    %4 = vector.broadcast %cst_2 : f32 to vector<16x1xf32>
    %5 = arith.divf %3, %4 : vector<16x1xf32>
    %6 = vector.broadcast %5 : vector<16x1xf32> to vector<16x32xf32>
    %7 = arith.subf %1, %6 : vector<16x32xf32>
    %8 = arith.mulf %7, %7 : vector<16x32xf32>
    %cst_3 = arith.constant dense<0.000000e+00> : vector<16xf32>
    %9 = vector.multi_reduction <add>, %8, %cst_3 [1] : vector<16x32xf32> to vector<16xf32>
    %10 = vector.shape_cast %9 : vector<16xf32> to vector<16x1xf32>
    %cst_4 = arith.constant 3.200000e+01 : f32
    %11 = vector.broadcast %cst_4 : f32 to vector<16x1xf32>
    %12 = arith.divf %10, %11 : vector<16x1xf32>
    %13 = vector.broadcast %5 : vector<16x1xf32> to vector<16x32xf32>
    %14 = arith.subf %1, %13 : vector<16x32xf32>
    %cst_5 = arith.constant 9.99999974E-6 : f32
    %15 = vector.broadcast %cst_5 : f32 to vector<16x1xf32>
    %16 = arith.addf %12, %15 : vector<16x1xf32>
    %17 = math.rsqrt %16 : vector<16x1xf32>
    %18 = vector.broadcast %17 : vector<16x1xf32> to vector<16x32xf32>
    %19 = arith.mulf %14, %18 : vector<16x32xf32>
    %c0_6 = arith.constant 0 : index
    %c0_7 = arith.constant 0 : index
    %20 = vector.load %arg3[%c0_6, %c0_7] : memref<1x32xf32, #tpu.memory_space<vmem>>, vector<1x32xf32>
    %21 = vector.broadcast %20 : vector<1x32xf32> to vector<16x32xf32>
    %22 = arith.mulf %19, %21 : vector<16x32xf32>
    %c0_8 = arith.constant 0 : index
    %c0_9 = arith.constant 0 : index
    %23 = vector.load %arg4[%c0_8, %c0_9] : memref<1x32xf32, #tpu.memory_space<vmem>>, vector<1x32xf32>
    %24 = vector.broadcast %23 : vector<1x32xf32> to vector<16x32xf32>
    %25 = arith.addf %22, %24 : vector<16x32xf32>
    %26 = arith.mulf %25, %25 : vector<16x32xf32>
    %cst_10 = arith.constant dense<0.000000e+00> : vector<16xf32>
    %27 = vector.multi_reduction <add>, %26, %cst_10 [1] : vector<16x32xf32> to vector<16xf32>
    %28 = math.sqrt %27 : vector<16xf32>
    %29 = tpu.iota {dimensions = array<i32: 0>} : vector<16x1xi32>
    %c0_i32 = arith.constant 0 : i32
    %30 = vector.broadcast %c0_i32 : i32 to vector<16x1xi32>
    %31 = arith.cmpi ne, %29, %30 : vector<16x1xi32>
    %32 = arith.extui %31 : vector<16x1xi1> to vector<16x1xi32>
    %33 = arith.sitofp %32 : vector<16x1xi32> to vector<16x1xf32>
    %c15_i32 = arith.constant 15 : i32
    %34 = vector.broadcast %c15_i32 : i32 to vector<16x1xi32>
    %35 = arith.cmpi ne, %29, %34 : vector<16x1xi32>
    %36 = arith.extui %35 : vector<16x1xi1> to vector<16x1xi32>
    %37 = arith.sitofp %36 : vector<16x1xi32> to vector<16x1xf32>
    %c1_i32 = arith.constant 1 : i32
    %38 = tpu.dynamic_rotate %25 by %c1_i32 dim 0 : vector<16x32xf32>, i32 -> vector<16x32xf32>
    %39 = vector.broadcast %33 : vector<16x1xf32> to vector<16x32xf32>
    %40 = arith.mulf %38, %39 : vector<16x32xf32>
    %c15_i32_11 = arith.constant 15 : i32
    %41 = tpu.dynamic_rotate %25 by %c15_i32_11 dim 0 : vector<16x32xf32>, i32 -> vector<16x32xf32>
    %42 = vector.broadcast %37 : vector<16x1xf32> to vector<16x32xf32>
    %43 = arith.mulf %41, %42 : vector<16x32xf32>
    %44 = tpu.concatenate %40, %25, %43 in 1 : vector<16x32xf32>, vector<16x32xf32>, vector<16x32xf32> -> vector<16x96xf32>
    %45 = arith.truncf %44 : vector<16x96xf32> to vector<16x96xbf16>
    %c0_12 = arith.constant 0 : index
    %c0_13 = arith.constant 0 : index
    %46 = vector.load %arg5[%c0_12, %c0_13] : memref<96x64xbf16, #tpu.memory_space<vmem>>, vector<96x64xbf16>
    %cst_14 = arith.constant dense<0.000000e+00> : vector<16x64xf32>
    %47 = tpu.matmul %45, %46, %cst_14 {dimension_numbers = #tpu.dot_dimension_numbers<[1], [0], [0], [1], [0, 0, 1, 1], [], []>} : vector<16x96xbf16>, vector<96x64xbf16>, vector<16x64xf32> -> vector<16x64xf32>
    %c0_15 = arith.constant 0 : index
    %c0_16 = arith.constant 0 : index
    %48 = vector.load %arg6[%c0_15, %c0_16] : memref<1x64xf32, #tpu.memory_space<vmem>>, vector<1x64xf32>
    %49 = vector.broadcast %48 : vector<1x64xf32> to vector<16x64xf32>
    %50 = arith.addf %47, %49 : vector<16x64xf32>
    %cst_17 = arith.constant 0.000000e+00 : f32
    %51 = vector.broadcast %cst_17 : f32 to vector<16x64xf32>
    %52 = arith.maximumf %50, %51 : vector<16x64xf32>
    %c1_i32_18 = arith.constant 1 : i32
    %53 = tpu.dynamic_rotate %52 by %c1_i32_18 dim 0 : vector<16x64xf32>, i32 -> vector<16x64xf32>
    %54 = vector.broadcast %33 : vector<16x1xf32> to vector<16x64xf32>
    %55 = arith.mulf %53, %54 : vector<16x64xf32>
    %c15_i32_19 = arith.constant 15 : i32
    %56 = tpu.dynamic_rotate %52 by %c15_i32_19 dim 0 : vector<16x64xf32>, i32 -> vector<16x64xf32>
    %57 = vector.broadcast %37 : vector<16x1xf32> to vector<16x64xf32>
    %58 = arith.mulf %56, %57 : vector<16x64xf32>
    %59 = tpu.concatenate %55, %52, %58 in 1 : vector<16x64xf32>, vector<16x64xf32>, vector<16x64xf32> -> vector<16x192xf32>
    %60 = arith.truncf %59 : vector<16x192xf32> to vector<16x192xbf16>
    %c0_20 = arith.constant 0 : index
    %c0_21 = arith.constant 0 : index
    %61 = vector.load %arg7[%c0_20, %c0_21] : memref<192x64xbf16, #tpu.memory_space<vmem>>, vector<192x64xbf16>
    %cst_22 = arith.constant dense<0.000000e+00> : vector<16x64xf32>
    %62 = tpu.matmul %60, %61, %cst_22 {dimension_numbers = #tpu.dot_dimension_numbers<[1], [0], [0], [1], [0, 0, 1, 1], [], []>} : vector<16x192xbf16>, vector<192x64xbf16>, vector<16x64xf32> -> vector<16x64xf32>
    %c0_23 = arith.constant 0 : index
    %c0_24 = arith.constant 0 : index
    %63 = vector.load %arg8[%c0_23, %c0_24] : memref<1x64xf32, #tpu.memory_space<vmem>>, vector<1x64xf32>
    %64 = vector.broadcast %63 : vector<1x64xf32> to vector<16x64xf32>
    %65 = arith.addf %62, %64 : vector<16x64xf32>
    %cst_25 = arith.constant 0.000000e+00 : f32
    %66 = vector.broadcast %cst_25 : f32 to vector<16x64xf32>
    %67 = arith.maximumf %65, %66 : vector<16x64xf32>
    %c0_26 = arith.constant 0 : index
    %c0_27 = arith.constant 0 : index
    %68 = vector.load %arg9[%c0_26, %c0_27] : memref<1x64xf32, #tpu.memory_space<vmem>>, vector<1x64xf32>
    %69 = vector.broadcast %68 : vector<1x64xf32> to vector<16x64xf32>
    %70 = arith.mulf %67, %69 : vector<16x64xf32>
    %cst_28 = arith.constant dense<0.000000e+00> : vector<16xf32>
    %71 = vector.multi_reduction <add>, %70, %cst_28 [1] : vector<16x64xf32> to vector<16xf32>
    %c0_29 = arith.constant 0 : index
    %72 = memref.load %arg10[%c0_29] : memref<1xf32, #tpu.memory_space<smem>>
    %73 = vector.broadcast %72 : f32 to vector<16xf32>
    %74 = arith.addf %71, %73 : vector<16xf32>
    %c0_30 = arith.constant 0 : index
    %c0_31 = arith.constant 0 : index
    %c0_32 = arith.constant 0 : index
    %75 = vector.load %arg2[%c0_30, %c0_31, %c0_32] : memref<1x1x16xi32, #tpu.memory_space<vmem>>, vector<1x1x16xi32>
    %76 = vector.shape_cast %75 : vector<1x1x16xi32> to vector<1x16xi32>
    %c0_i32_33 = arith.constant 0 : i32
    %77 = vector.broadcast %c0_i32_33 : i32 to vector<1x16xi32>
    %78 = arith.cmpi ne, %76, %77 : vector<1x16xi32>
    %79 = vector.shape_cast %74 : vector<16xf32> to vector<1x16xf32>
    %cst_34 = arith.constant 0.000000e+00 : f32
    %80 = vector.broadcast %cst_34 : f32 to vector<1x16xf32>
    %81 = arith.select %78, %80, %79 : vector<1x16xi1>, vector<1x16xf32>
    %c0_35 = arith.constant 0 : index
    %c0_36 = arith.constant 0 : index
    %c0_37 = arith.constant 0 : index
    %82 = vector.load %arg11[%c0_35, %c0_36, %c0_37] : memref<1x1x16xf32, #tpu.memory_space<vmem>>, vector<1x1x16xf32>
    %83 = vector.shape_cast %82 : vector<1x1x16xf32> to vector<1x16xf32>
    %84 = vector.shape_cast %81 : vector<1x16xf32> to vector<1x1x16xf32>
    tpu.vector_store %arg11[%c0_35, %c0_36, %c0_37], %84 {strides = array<i32>} : memref<1x1x16xf32, #tpu.memory_space<vmem>>, vector<1x1x16xf32>,
    %85 = vector.shape_cast %28 : vector<16xf32> to vector<1x16xf32>
    %c0_38 = arith.constant 0 : index
    %c0_39 = arith.constant 0 : index
    %c0_40 = arith.constant 0 : index
    %86 = vector.load %arg12[%c0_38, %c0_39, %c0_40] : memref<1x1x16xf32, #tpu.memory_space<vmem>>, vector<1x1x16xf32>
    %87 = vector.shape_cast %86 : vector<1x1x16xf32> to vector<1x16xf32>
    %88 = vector.shape_cast %85 : vector<1x16xf32> to vector<1x1x16xf32>
    tpu.vector_store %arg12[%c0_38, %c0_39, %c0_40], %88 {strides = array<i32>} : memref<1x1x16xf32, #tpu.memory_space<vmem>>, vector<1x1x16xf32>,
    return
  }
  func.func @transform_0(%arg0: i32) -> (i32, i32, i32) {
    %c0_i32 = arith.constant 0 : i32
    %c0_i32_0 = arith.constant 0 : i32
    %c0_i32_1 = arith.constant 0 : i32
    return %arg0, %c0_i32, %c0_i32_0 : i32, i32, i32
  }
  func.func @transform_1(%arg0: i32) -> (i32, i32, i32) {
    %c0_i32 = arith.constant 0 : i32
    %c0_i32_0 = arith.constant 0 : i32
    %c0_i32_1 = arith.constant 0 : i32
    return %arg0, %c0_i32, %c0_i32_0 : i32, i32, i32
  }
  func.func @transform_2(%arg0: i32) -> (i32, i32) {
    %c0_i32 = arith.constant 0 : i32
    %c0_i32_0 = arith.constant 0 : i32
    %c0_i32_1 = arith.constant 0 : i32
    return %c0_i32, %c0_i32_0 : i32, i32
  }
  func.func @transform_3(%arg0: i32) -> (i32, i32) {
    %c0_i32 = arith.constant 0 : i32
    %c0_i32_0 = arith.constant 0 : i32
    %c0_i32_1 = arith.constant 0 : i32
    return %c0_i32, %c0_i32_0 : i32, i32
  }
  func.func @transform_4(%arg0: i32) -> (i32, i32) {
    %c0_i32 = arith.constant 0 : i32
    %c0_i32_0 = arith.constant 0 : i32
    %c0_i32_1 = arith.constant 0 : i32
    return %c0_i32, %c0_i32_0 : i32, i32
  }
  func.func @transform_5(%arg0: i32) -> (i32, i32) {
    %c0_i32 = arith.constant 0 : i32
    %c0_i32_0 = arith.constant 0 : i32
    %c0_i32_1 = arith.constant 0 : i32
    return %c0_i32, %c0_i32_0 : i32, i32
  }
  func.func @transform_6(%arg0: i32) -> (i32, i32) {
    %c0_i32 = arith.constant 0 : i32
    %c0_i32_0 = arith.constant 0 : i32
    %c0_i32_1 = arith.constant 0 : i32
    return %c0_i32, %c0_i32_0 : i32, i32
  }
  func.func @transform_7(%arg0: i32) -> (i32, i32) {
    %c0_i32 = arith.constant 0 : i32
    %c0_i32_0 = arith.constant 0 : i32
    %c0_i32_1 = arith.constant 0 : i32
    return %c0_i32, %c0_i32_0 : i32, i32
  }
  func.func @transform_8(%arg0: i32) -> (i32, i32) {
    %c0_i32 = arith.constant 0 : i32
    %c0_i32_0 = arith.constant 0 : i32
    %c0_i32_1 = arith.constant 0 : i32
    return %c0_i32, %c0_i32_0 : i32, i32
  }
  func.func @transform_9(%arg0: i32) -> i32 {
    %c0_i32 = arith.constant 0 : i32
    %c0_i32_0 = arith.constant 0 : i32
    return %c0_i32 : i32
  }
  func.func @transform_10(%arg0: i32) -> (i32, i32, i32) {
    %c0_i32 = arith.constant 0 : i32
    %c0_i32_0 = arith.constant 0 : i32
    %c0_i32_1 = arith.constant 0 : i32
    return %arg0, %c0_i32, %c0_i32_0 : i32, i32, i32
  }
  func.func @transform_11(%arg0: i32) -> (i32, i32, i32) {
    %c0_i32 = arith.constant 0 : i32
    %c0_i32_0 = arith.constant 0 : i32
    %c0_i32_1 = arith.constant 0 : i32
    return %arg0, %c0_i32, %c0_i32_0 : i32, i32, i32
  }
}

</mosaic_0001>

<llo_original>
// kernel: tpu_custom_call.1
$region0: #{tpu_custom_call.1}
  #allocation0 [shape = 'u32[]', space=smem, size = 0x4, offset = 0x4, fixed_abs, tag = 'smem constant byte address 0x4 - core index']
  #allocation1 [shape = 'u32[144,128]{1,0:T(1,128)}', space=vmem, size = 0x12000, scoped, tag = 'internal scratch']
  #allocation2 [shape = 'f32[1]{0:T(128)S(6)}', space=smem, size = 0x200, scoped, tag = 'scoped memory for tpu_custom_call.1']
  %s0 = inlined_call_operand.vmem [shape: f32[2,16,32], index: 0, kind: input, shape index: {}]
  %s1 = inlined_call_operand.vmem [shape: s32[2,1,16], index: 1, kind: input, shape index: {}]
  %s2 = inlined_call_operand.vmem [shape: f32[1,32], index: 2, kind: input, shape index: {}]
  %s3 = inlined_call_operand.vmem [shape: f32[1,32], index: 3, kind: input, shape index: {}]
  %s4 = inlined_call_operand.vmem [shape: bf16[96,64], index: 4, kind: input, shape index: {}]
  %s5 = inlined_call_operand.vmem [shape: f32[1,64], index: 5, kind: input, shape index: {}]
  %s6 = inlined_call_operand.vmem [shape: bf16[192,64], index: 6, kind: input, shape index: {}]
  %s7 = inlined_call_operand.vmem [shape: f32[1,64], index: 7, kind: input, shape index: {}]
  %s8 = inlined_call_operand.vmem [shape: f32[1,64], index: 8, kind: input, shape index: {}]
  %s9 = inlined_call_operand.<no memory space> [shape: f32[1], index: 9, kind: input, shape index: {}]
  %s10 = inlined_call_operand.hbm [shape: f32[2,1,16], index: 10, kind: output, shape index: {0}]
  %s11 = inlined_call_operand.hbm [shape: f32[2,1,16], index: 11, kind: output, shape index: {1}]
  %12 = xla_tuple %s10, %s11
  %s13 = sld [smem:[#allocation0]]
  $region81: #{tpu_custom_call.1} parent=0
    _
  %s15 = ssub.s32 1, %s13
  %s16 = scalar_select 0, %s15, %s13
  %17 = sst [smem:[#allocation2]] %s9
  $region1: #{tpu_custom_call.1} parent=0
    #allocation3 [shape = 'u8[1024]{0}', space=vmem, size = 0x400, scoped, tag = 'output window, operand 0']
    #allocation4 [shape = 's32[2]{0}', space=sflag, size = 0x8, scoped, tag = 'scoped memory for tpu_custom_call.1']
    #allocation5 [shape = 'u8[1024]{0}', space=vmem, size = 0x400, scoped, tag = 'output window, operand 1']
    #allocation6 [shape = 's32[2]{0}', space=sflag, size = 0x8, scoped, tag = 'scoped memory for tpu_custom_call.1']
    %18 = vsyncpa [#allocation4], 0
    %s19 = scalar_lea.sflag [#allocation4], 1
    %20 = vsyncpa %s19, 0
    %21 = vsyncpa [#allocation6], 0
    %s22 = scalar_lea.sflag [#allocation6], 1
    %23 = vsyncpa %s22, 0
    loop: start=0, step=1, limit=4
    $region2: #{tpu_custom_call.1} parent=1 // loop_pre_header
      _
    $region3: #{tpu_custom_call.1} parent=1 // loop_header
      %s25 = sphi 0, %s29
      %p26 = scmp.ge.s32.totalorder %s25, 4
      %s35 = sphi 0, %s37
      %s38 = sphi 0, %s35
      %s39 = sphi 0, %s38
      %s55 = sphi 0, %s39
      %s61 = sphi 0, %s63
      %s64 = sphi 0, %s61
      %s65 = sphi 0, %s64
      %s81 = sphi 0, %s65
      %s85 = sphi 0, %s85
      %s87 = sphi 0, %s85
      %s88 = sphi 0, %s87
      %s102 = sphi 0, %s88
      %s106 = sphi 0, %s106
      %s108 = sphi 0, %s106
      %s109 = sphi 0, %s108
      %s123 = sphi 0, %s109
      %s127 = sphi 0, %s127
      %s129 = sphi 0, %s127
      %s130 = sphi 0, %s129
      %s144 = sphi 0, %s130
      %s148 = sphi 0, %s148
      %s150 = sphi 0, %s148
      %s151 = sphi 0, %s150
      %s165 = sphi 0, %s151
      %s169 = sphi 0, %s169
      %s171 = sphi 0, %s169
      %s172 = sphi 0, %s171
      %s186 = sphi 0, %s172
      %s190 = sphi 0, %s190
      %s192 = sphi 0, %s190
      %s193 = sphi 0, %s192
      %s207 = sphi 0, %s193
      %s211 = sphi 0, %s211
      %s213 = sphi 0, %s211
      %s214 = sphi 0, %s213
      %s228 = sphi 0, %s214
      %s232 = sphi 0, %s232
      %s234 = sphi 0, %s232
      %s235 = sphi 0, %s234
      %s249 = sphi 0, %s235
      %s255 = sphi 0, %s257
      %s258 = sphi 0, %s255
      %s259 = sphi 0, %s258
      %s275 = sphi 0, %s259
      %s281 = sphi 0, %s283
      %s284 = sphi 0, %s281
      %s285 = sphi 0, %s284
      %s301 = sphi 0, %s285
    $region4: #{tpu_custom_call.1} parent=1 // loop_header_branch
      %28 = sbr.rel (%p26) target = $region8
    $region5: #{tpu_custom_call.1} parent=1 // loop_body
      %s30 = ssub.s32 %s25, 1
      %s31 = ssub.s32 %s25, 2
      %s32 = sadd.s32 %s25, 1
      %s33 = ssub.s32 %s25, %s32
      %p34 = scmp.eq.s32.totalorder %s33, 0
      %s36 = sadd.s32 %s35, 1
      %s37 = scalar_select %p34, %s35, %s36
      %p40 = pneg %p34
      %p41 = scmp.eq.s32.totalorder %s25, 1
      %p42 = por %p40, %p41
      %p43 = scmp.ne.s32.totalorder %s35, %s38
      %p44 = scmp.eq.s32.totalorder %s25, 0
      %p45 = por %p43, %p44
      %p46 = scmp.ne.s32.totalorder %s35, %s38
      %p47 = scmp.eq.s32.totalorder %s30, 1
      %p48 = por %p46, %p47
      %p49 = scmp.ne.s32.totalorder %s38, %s39
      %p50 = scmp.eq.s32.totalorder %s30, 0
      %p51 = por %p49, %p50
      %p52 = scmp.ne.s32.totalorder %s38, %s39
      %p53 = scmp.eq.s32.totalorder %s31, 1
      %p54 = por %p52, %p53
      %p56 = scmp.ne.s32.totalorder %s39, %s55
      %p57 = scmp.eq.s32.totalorder %s31, 0
      %p58 = por %p56, %p57
      %s59 = ssub.s32 %s25, %s32
      %p60 = scmp.eq.s32.totalorder %s59, 0
      %s62 = sadd.s32 %s61, 1
      %s63 = scalar_select %p60, %s61, %s62
      %p66 = pneg %p60
      %p67 = scmp.eq.s32.totalorder %s25, 1
      %p68 = por %p66, %p67
      %p69 = scmp.ne.s32.totalorder %s61, %s64
      %p70 = scmp.eq.s32.totalorder %s25, 0
      %p71 = por %p69, %p70
      %p72 = scmp.ne.s32.totalorder %s61, %s64
      %p73 = scmp.eq.s32.totalorder %s30, 1
      %p74 = por %p72, %p73
      %p75 = scmp.ne.s32.totalorder %s64, %s65
      %p76 = scmp.eq.s32.totalorder %s30, 0
      %p77 = por %p75, %p76
      %p78 = scmp.ne.s32.totalorder %s64, %s65
      %p79 = scmp.eq.s32.totalorder %s31, 1
      %p80 = por %p78, %p79
      %p82 = scmp.ne.s32.totalorder %s65, %s81
      %p83 = scmp.eq.s32.totalorder %s31, 0
      %p84 = por %p82, %p83
      %s86 = sadd.s32 %s85, 1
      %p89 = scmp.eq.s32.totalorder %s25, 1
      %p90 = scmp.ne.s32.totalorder %s85, %s87
      %p91 = scmp.eq.s32.totalorder %s25, 0
      %p92 = por %p90, %p91
      %p93 = scmp.ne.s32.totalorder %s85, %s87
      %p94 = scmp.eq.s32.totalorder %s30, 1
      %p95 = por %p93, %p94
      %p96 = scmp.ne.s32.totalorder %s87, %s88
      %p97 = scmp.eq.s32.totalorder %s30, 0
      %p98 = por %p96, %p97
      %p99 = scmp.ne.s32.totalorder %s87, %s88
      %p100 = scmp.eq.s32.totalorder %s31, 1
      %p101 = por %p99, %p100
      %p103 = scmp.ne.s32.totalorder %s88, %s102
      %p104 = scmp.eq.s32.totalorder %s31, 0
      %p105 = por %p103, %p104
      %s107 = sadd.s32 %s106, 1
      %p110 = scmp.eq.s32.totalorder %s25, 1
      %p111 = scmp.ne.s32.totalorder %s106, %s108
      %p112 = scmp.eq.s32.totalorder %s25, 0
      %p113 = por %p111, %p112
      %p114 = scmp.ne.s32.totalorder %s106, %s108
      %p115 = scmp.eq.s32.totalorder %s30, 1
      %p116 = por %p114, %p115
      %p117 = scmp.ne.s32.totalorder %s108, %s109
      %p118 = scmp.eq.s32.totalorder %s30, 0
      %p119 = por %p117, %p118
      %p120 = scmp.ne.s32.totalorder %s108, %s109
      %p121 = scmp.eq.s32.totalorder %s31, 1
      %p122 = por %p120, %p121
      %p124 = scmp.ne.s32.totalorder %s109, %s123
      %p125 = scmp.eq.s32.totalorder %s31, 0
      %p126 = por %p124, %p125
      %s128 = sadd.s32 %s127, 1
      %p131 = scmp.eq.s32.totalorder %s25, 1
      %p132 = scmp.ne.s32.totalorder %s127, %s129
      %p133 = scmp.eq.s32.totalorder %s25, 0
      %p134 = por %p132, %p133
      %p135 = scmp.ne.s32.totalorder %s127, %s129
      %p136 = scmp.eq.s32.totalorder %s30, 1
      %p137 = por %p135, %p136
      %p138 = scmp.ne.s32.totalorder %s129, %s130
      %p139 = scmp.eq.s32.totalorder %s30, 0
      %p140 = por %p138, %p139
      %p141 = scmp.ne.s32.totalorder %s129, %s130
      %p142 = scmp.eq.s32.totalorder %s31, 1
      %p143 = por %p141, %p142
      %p145 = scmp.ne.s32.totalorder %s130, %s144
      %p146 = scmp.eq.s32.totalorder %s31, 0
      %p147 = por %p145, %p146
      %s149 = sadd.s32 %s148, 1
      %p152 = scmp.eq.s32.totalorder %s25, 1
      %p153 = scmp.ne.s32.totalorder %s148, %s150
      %p154 = scmp.eq.s32.totalorder %s25, 0
      %p155 = por %p153, %p154
      %p156 = scmp.ne.s32.totalorder %s148, %s150
      %p157 = scmp.eq.s32.totalorder %s30, 1
      %p158 = por %p156, %p157
      %p159 = scmp.ne.s32.totalorder %s150, %s151
      %p160 = scmp.eq.s32.totalorder %s30, 0
      %p161 = por %p159, %p160
      %p162 = scmp.ne.s32.totalorder %s150, %s151
      %p163 = scmp.eq.s32.totalorder %s31, 1
      %p164 = por %p162, %p163
      %p166 = scmp.ne.s32.totalorder %s151, %s165
      %p167 = scmp.eq.s32.totalorder %s31, 0
      %p168 = por %p166, %p167
      %s170 = sadd.s32 %s169, 1
      %p173 = scmp.eq.s32.totalorder %s25, 1
      %p174 = scmp.ne.s32.totalorder %s169, %s171
      %p175 = scmp.eq.s32.totalorder %s25, 0
      %p176 = por %p174, %p175
      %p177 = scmp.ne.s32.totalorder %s169, %s171
      %p178 = scmp.eq.s32.totalorder %s30, 1
      %p179 = por %p177, %p178
      %p180 = scmp.ne.s32.totalorder %s171, %s172
      %p181 = scmp.eq.s32.totalorder %s30, 0
      %p182 = por %p180, %p181
      %p183 = scmp.ne.s32.totalorder %s171, %s172
      %p184 = scmp.eq.s32.totalorder %s31, 1
      %p185 = por %p183, %p184
      %p187 = scmp.ne.s32.totalorder %s172, %s186
      %p188 = scmp.eq.s32.totalorder %s31, 0
      %p189 = por %p187, %p188
      %s191 = sadd.s32 %s190, 1
      %p194 = scmp.eq.s32.totalorder %s25, 1
      %p195 = scmp.ne.s32.totalorder %s190, %s192
      %p196 = scmp.eq.s32.totalorder %s25, 0
      %p197 = por %p195, %p196
      %p198 = scmp.ne.s32.totalorder %s190, %s192
      %p199 = scmp.eq.s32.totalorder %s30, 1
      %p200 = por %p198, %p199
      %p201 = scmp.ne.s32.totalorder %s192, %s193
      %p202 = scmp.eq.s32.totalorder %s30, 0
      %p203 = por %p201, %p202
      %p204 = scmp.ne.s32.totalorder %s192, %s193
      %p205 = scmp.eq.s32.totalorder %s31, 1
      %p206 = por %p204, %p205
      %p208 = scmp.ne.s32.totalorder %s193, %s207
      %p209 = scmp.eq.s32.totalorder %s31, 0
      %p210 = por %p208, %p209
      %s212 = sadd.s32 %s211, 1
      %p215 = scmp.eq.s32.totalorder %s25, 1
      %p216 = scmp.ne.s32.totalorder %s211, %s213
      %p217 = scmp.eq.s32.totalorder %s25, 0
      %p218 = por %p216, %p217
      %p219 = scmp.ne.s32.totalorder %s211, %s213
      %p220 = scmp.eq.s32.totalorder %s30, 1
      %p221 = por %p219, %p220
      %p222 = scmp.ne.s32.totalorder %s213, %s214
      %p223 = scmp.eq.s32.totalorder %s30, 0
      %p224 = por %p222, %p223
      %p225 = scmp.ne.s32.totalorder %s213, %s214
      %p226 = scmp.eq.s32.totalorder %s31, 1
      %p227 = por %p225, %p226
      %p229 = scmp.ne.s32.totalorder %s214, %s228
      %p230 = scmp.eq.s32.totalorder %s31, 0
      %p231 = por %p229, %p230
      %s233 = sadd.s32 %s232, 1
      %p236 = scmp.eq.s32.totalorder %s25, 1
      %p237 = scmp.ne.s32.totalorder %s232, %s234
      %p238 = scmp.eq.s32.totalorder %s25, 0
      %p239 = por %p237, %p238
      %p240 = scmp.ne.s32.totalorder %s232, %s234
      %p241 = scmp.eq.s32.totalorder %s30, 1
      %p242 = por %p240, %p241
      %p243 = scmp.ne.s32.totalorder %s234, %s235
      %p244 = scmp.eq.s32.totalorder %s30, 0
      %p245 = por %p243, %p244
      %p246 = scmp.ne.s32.totalorder %s234, %s235
      %p247 = scmp.eq.s32.totalorder %s31, 1
      %p248 = por %p246, %p247
      %p250 = scmp.ne.s32.totalorder %s235, %s249
      %p251 = scmp.eq.s32.totalorder %s31, 0
      %p252 = por %p250, %p251
      %s253 = ssub.s32 %s25, %s32
      %p254 = scmp.eq.s32.totalorder %s253, 0
      %s256 = sadd.s32 %s255, 1
      %s257 = scalar_select %p254, %s255, %s256
      %p260 = pneg %p254
      %p261 = scmp.eq.s32.totalorder %s25, 1
      %p262 = por %p260, %p261
      %p263 = scmp.ne.s32.totalorder %s255, %s258
      %p264 = scmp.eq.s32.totalorder %s25, 0
      %p265 = por %p263, %p264
      %p266 = scmp.ne.s32.totalorder %s255, %s258
      %p267 = scmp.eq.s32.totalorder %s30, 1
      %p268 = por %p266, %p267
      %p269 = scmp.ne.s32.totalorder %s258, %s259
      %p270 = scmp.eq.s32.totalorder %s30, 0
      %p271 = por %p269, %p270
      %p272 = scmp.ne.s32.totalorder %s258, %s259
      %p273 = scmp.eq.s32.totalorder %s31, 1
      %p274 = por %p272, %p273
      %p276 = scmp.ne.s32.totalorder %s259, %s275
      %p277 = scmp.eq.s32.totalorder %s31, 0
      %p278 = por %p276, %p277
      %s279 = ssub.s32 %s25, %s32
      %p280 = scmp.eq.s32.totalorder %s279, 0
      %s282 = sadd.s32 %s281, 1
      %s283 = scalar_select %p280, %s281, %s282
      %p286 = pneg %p280
      %p287 = scmp.eq.s32.totalorder %s25, 1
      %p288 = por %p286, %p287
      %p289 = scmp.ne.s32.totalorder %s281, %s284
      %p290 = scmp.eq.s32.totalorder %s25, 0
      %p291 = por %p289, %p290
      %p292 = scmp.ne.s32.totalorder %s281, %s284
      %p293 = scmp.eq.s32.totalorder %s30, 1
      %p294 = por %p292, %p293
      %p295 = scmp.ne.s32.totalorder %s284, %s285
      %p296 = scmp.eq.s32.totalorder %s30, 0
      %p297 = por %p295, %p296
      %p298 = scmp.ne.s32.totalorder %s284, %s285
      %p299 = scmp.eq.s32.totalorder %s31, 1
      %p300 = por %p298, %p299
      %p302 = scmp.ne.s32.totalorder %s285, %s301
      %p303 = scmp.eq.s32.totalorder %s31, 0
      %p304 = por %p302, %p303
      %p305 = scmp.le.s32.totalorder 1, %s25
      %p306 = scmp.lt.s32.totalorder %s25, 3
      %p307 = pnand %p305, %p306
      %p308 = pneg %p307
      // Predicated region
      $region9: #{tpu_custom_call.1} parent=5 // pred_check
        _
      $region10: #{tpu_custom_call.1} parent=5 // pred_check_branch
        %310 = sbr.rel (%p307) target = $region12
      $region11: #{tpu_custom_call.1} parent=5 // pred_region
        %s311 = ssub.s32 %s25, 1
        // Predicated region
        $region13: #{tpu_custom_call.1} parent=11 // pred_check
          %p312 = pneg %p98
        $region14: #{tpu_custom_call.1} parent=11 // pred_check_branch
          %314 = sbr.rel (%p312) target = $region16
        $region15: #{tpu_custom_call.1} parent=11 // pred_region
          _
        $region16: #{tpu_custom_call.1} parent=11 // pred_fallthru
          _
        // Predicated region
        $region17: #{tpu_custom_call.1} parent=11 // pred_check
          %p315 = pneg %p119
        $region18: #{tpu_custom_call.1} parent=11 // pred_check_branch
          %317 = sbr.rel (%p315) target = $region20
        $region19: #{tpu_custom_call.1} parent=11 // pred_region
          _
        $region20: #{tpu_custom_call.1} parent=11 // pred_fallthru
          _
        // Predicated region
        $region21: #{tpu_custom_call.1} parent=11 // pred_check
          %p318 = pneg %p140
        $region22: #{tpu_custom_call.1} parent=11 // pred_check_branch
          %320 = sbr.rel (%p318) target = $region24
        $region23: #{tpu_custom_call.1} parent=11 // pred_region
          _
        $region24: #{tpu_custom_call.1} parent=11 // pred_fallthru
          _
        // Predicated region
        $region25: #{tpu_custom_call.1} parent=11 // pred_check
          %p321 = pneg %p161
        $region26: #{tpu_custom_call.1} parent=11 // pred_check_branch
          %323 = sbr.rel (%p321) target = $region28
        $region27: #{tpu_custom_call.1} parent=11 // pred_region
          _
        $region28: #{tpu_custom_call.1} parent=11 // pred_fallthru
          _
        // Predicated region
        $region29: #{tpu_custom_call.1} parent=11 // pred_check
          %p324 = pneg %p182
        $region30: #{tpu_custom_call.1} parent=11 // pred_check_branch
          %326 = sbr.rel (%p324) target = $region32
        $region31: #{tpu_custom_call.1} parent=11 // pred_region
          _
        $region32: #{tpu_custom_call.1} parent=11 // pred_fallthru
          _
        // Predicated region
        $region33: #{tpu_custom_call.1} parent=11 // pred_check
          %p327 = pneg %p203
        $region34: #{tpu_custom_call.1} parent=11 // pred_check_branch
          %329 = sbr.rel (%p327) target = $region36
        $region35: #{tpu_custom_call.1} parent=11 // pred_region
          _
        $region36: #{tpu_custom_call.1} parent=11 // pred_fallthru
          _
        // Predicated region
        $region37: #{tpu_custom_call.1} parent=11 // pred_check
          %p330 = pneg %p224
        $region38: #{tpu_custom_call.1} parent=11 // pred_check_branch
          %332 = sbr.rel (%p330) target = $region40
        $region39: #{tpu_custom_call.1} parent=11 // pred_region
          _
        $region40: #{tpu_custom_call.1} parent=11 // pred_fallthru
          _
        // Predicated region
        $region41: #{tpu_custom_call.1} parent=11 // pred_check
          %p333 = pneg %p245
        $region42: #{tpu_custom_call.1} parent=11 // pred_check_branch
          %335 = sbr.rel (%p333) target = $region44
        $region43: #{tpu_custom_call.1} parent=11 // pred_region
          _
        $region44: #{tpu_custom_call.1} parent=11 // pred_fallthru
          _
      $region12: #{tpu_custom_call.1} parent=5 // pred_fallthru
        _
      %p336 = scmp.lt.s32.totalorder %s25, 2
      // Predicated region
      $region45: #{tpu_custom_call.1} parent=5 // pred_check
        %p337 = pneg %p336
      $region46: #{tpu_custom_call.1} parent=5 // pred_check_branch
        %339 = sbr.rel (%p337) target = $region48
      $region47: #{tpu_custom_call.1} parent=5 // pred_region
        // Predicated region
        $region49: #{tpu_custom_call.1} parent=47 // pred_check
          %p340 = pneg %p45
        $region50: #{tpu_custom_call.1} parent=47 // pred_check_branch
          %342 = sbr.rel (%p340) target = $region52
        $region51: #{tpu_custom_call.1} parent=47 // pred_region
          %p343 = scmp.lt.s32.totalorder %s25, 1
          %s344 = scalar_select %p343, %s25, 1
          %s345 = smul.addr %s344, 2
          %s346 = smul.addr %s345, 8
          %s347 = scalar_lea.vmem %s0, %s346
        $region52: #{tpu_custom_call.1} parent=47 // pred_fallthru
          _
        // Predicated region
        $region53: #{tpu_custom_call.1} parent=47 // pred_check
          %p348 = pneg %p71
        $region54: #{tpu_custom_call.1} parent=47 // pred_check_branch
          %350 = sbr.rel (%p348) target = $region56
        $region55: #{tpu_custom_call.1} parent=47 // pred_region
          %p351 = scmp.lt.s32.totalorder %s25, 1
          %s352 = scalar_select %p351, %s25, 1
          %s353 = scalar_lea.vmem %s1, %s352
        $region56: #{tpu_custom_call.1} parent=47 // pred_fallthru
          _
      $region48: #{tpu_custom_call.1} parent=5 // pred_fallthru
        _
      %p354 = scmp.le.s32.totalorder 1, %s25
      %p355 = scmp.lt.s32.totalorder %s25, 3
      %p356 = pnand %p354, %p355
      %p357 = pneg %p356
      // Predicated region
      $region57: #{tpu_custom_call.1} parent=5 // pred_check
        _
      $region58: #{tpu_custom_call.1} parent=5 // pred_check_branch
        %359 = sbr.rel (%p356) target = $region60
      $region59: #{tpu_custom_call.1} parent=5 // pred_region
        %s360 = ssub.s32 %s25, 1
        %p361 = scmp.lt.s32.totalorder %s30, 1
        %s362 = scalar_select %p361, %s30, 1
        %s363 = smul.addr %s362, 2
        %s364 = smul.addr %s363, 8
        %s365 = scalar_lea.vmem %s0, %s364
        %p366 = pneg %p51
        %p367 = pneg %p48
        %p368 = scmp.lt.s32.totalorder %s30, 1
        %s369 = scalar_select %p368, %s30, 1
        %s370 = scalar_lea.vmem %s1, %s369
        %p371 = pneg %p77
        %p372 = pneg %p74
        %p373 = pneg %p98
        %p374 = pneg %p95
        %p375 = pneg %p119
        %p376 = pneg %p116
        %p377 = pneg %p140
        %p378 = pneg %p137
        %p379 = pneg %p161
        %p380 = pneg %p158
        %p381 = pneg %p182
        %p382 = pneg %p179
        %p383 = pneg %p203
        %p384 = pneg %p200
        %p385 = pneg %p224
        %p386 = pneg %p221
        %p387 = pneg %p245
        %p388 = pneg %p242
        %p389 = pneg %p271
        %p390 = pneg %p268
        %s391 = sand.u32 %s258, 1
        %s392 = scalar_lea.sflag [#allocation4], %s391
        %s393 = sand.u32 %s258, 1
        %s394 = scalar_lea.vmem [#allocation3], %s393
        %p395 = pneg %p297
        %p396 = pneg %p294
        %s397 = sand.u32 %s284, 1
        %s398 = scalar_lea.sflag [#allocation6], %s397
        %s399 = sand.u32 %s284, 1
        %s400 = scalar_lea.vmem [#allocation5], %s399
        %p401 = scmp.lt.s32.totalorder %s30, 1
        %s402 = scalar_select %p401, %s30, 1
        %s403 = smul.addr %s402, 2
        %s404 = smul.addr %s403, 8
        %s405 = scalar_lea.vmem %s0, %s404
        %p406 = scmp.lt.s32.totalorder %s30, 1
        %s407 = scalar_select %p406, %s30, 1
        %s408 = scalar_lea.vmem %s1, %s407
        %v410 = vld [vmem:[%s405] sm:$0xff]
        %v411 = vld [vmem:[%s405 + $0x8] sm:$0xff]
        %vm412 = vcmask 261120
        %v413 = vsel %vm412, %v410, 0.0
        %414 = vadd.xlane.f32.xlu0 %v413
        %v415 = vpop.xlane.xlu0 %414
        %v416 = vsel %vm412, %v411, 0.0
        %417 = vadd.xlane.f32.xlu0 %v416
        %v418 = vpop.xlane.xlu0 %417
        %v419 = vrcp.pop 32.0
        %v420 = vmul.f32 %v415, %v419
        %v421 = vmul.f32 %v418, %v419
        %v422 = vsub.f32 %v410, %v420
        %v423 = vsub.f32 %v411, %v421
        %v424 = vmul.f32 %v422, %v422
        %v425 = vmul.f32 %v423, %v423
        %v426 = vsel %vm412, %v424, 0.0
        %427 = vadd.xlane.f32.xlu0 %v426
        %v428 = vpop.xlane.xlu0 %427
        %v429 = vsel %vm412, %v425, 0.0
        %430 = vadd.xlane.f32.xlu0 %v429
        %v431 = vpop.xlane.xlu0 %430
        %v432 = vmul.f32 %v428, %v419
        %v433 = vmul.f32 %v431, %v419
        %v434 = vadd.f32 %v432, 1e-05
        %v435 = vadd.f32 %v433, 1e-05
        %v436 = vrsqrt.pop %v434
        %v437 = vrsqrt.pop %v435
        %v438 = vmul.f32 %v422, %v436
        %v439 = vmul.f32 %v423, %v437
        %v440 = vld [vmem:[%s2] sm:$0x1]
        %v442 = vlaneseq
        %v443 = vshrl.u32 %v442, 7
        %v444 = vsub.s32 0, %v443
        %v445 = vrot.slane %v440, %v444
        %v447 = vmul.f32 %v438, %v445
        %v448 = vmul.f32 %v439, %v445
        %v449 = vld [vmem:[%s3] sm:$0x1]
        %v451 = vlaneseq
        %v452 = vshrl.u32 %v451, 7
        %v453 = vsub.s32 0, %v452
        %v454 = vrot.slane %v449, %v453
        %v456 = vadd.f32 %v447, %v454
        %v457 = vadd.f32 %v448, %v454
        %v458 = vmul.f32 %v456, %v456
        %v459 = vmul.f32 %v457, %v457
        %v460 = vsel %vm412, %v458, 0.0
        %461 = vadd.xlane.f32.xlu0 %v460
        %v462 = vpop.xlane.xlu0 %461
        %v463 = vsel %vm412, %v459, 0.0
        %464 = vadd.xlane.f32.xlu0 %v463
        %v465 = vpop.xlane.xlu0 %464
        %v466 = vrsqrt.pop %v462
        %v467 = vmul.f32 %v462, %v466
        %vm468 = vcmp.eq.f32.partialorder %v462, inf
        %v469 = vsel %vm468, %v462, %v467
        %vm470 = vcmp.eq.f32.partialorder %v462, 0.0
        %v471 = vand.u32 %v462, 2147483648
        %v472 = vsel %vm470, %v471, %v469
        %v473 = vrsqrt.pop %v465
        %v474 = vmul.f32 %v465, %v473
        %vm475 = vcmp.eq.f32.partialorder %v465, inf
        %v476 = vsel %vm475, %v465, %v474
        %vm477 = vcmp.eq.f32.partialorder %v465, 0.0
        %v478 = vand.u32 %v465, 2147483648
        %v479 = vsel %vm477, %v478, %v476
        %v480 = vlaneseq
        %v481 = vshrl.u32 %v480, 7
        %v482 = vadd.s32 %v481, 8
        %vm483 = vcmp.ne.s32.totalorder %v481, 0
        %vm484 = vcmp.ne.s32.totalorder %v482, 0
        %v485 = vsel %vm483, 1, 0
        %v486 = vsel %vm484, 1, 0
        %v487 = vcvt.s32.f32 %v485
        %v488 = vcvt.s32.f32 %v486
        %vm489 = vcmp.ne.s32.totalorder %v481, 15
        %vm490 = vcmp.ne.s32.totalorder %v482, 15
        %v491 = vsel %vm489, 1, 0
        %v492 = vsel %vm490, 1, 0
        %v493 = vcvt.s32.f32 %v491
        %v494 = vcvt.s32.f32 %v492
        %v495 = vrot.slane %v456, 7
        %v496 = vrot.slane %v457, 7
        %vm497 = vcmp.lt.s32.totalorder %v481, 1
        %v498 = vsel %vm497, %v495, %v496
        %v499 = vsel %vm497, %v496, %v495
        %v500 = vmul.f32 %v499, %v487
        %v501 = vmul.f32 %v498, %v488
        %v502 = vrot.slane %v456, 1
        %v503 = vrot.slane %v457, 1
        %vm504 = vcmp.lt.s32.totalorder %v481, 7
        %v505 = vsel %vm504, %v502, %v503
        %v506 = vsel %vm504, %v503, %v502
        %v507 = vmul.f32 %v505, %v493
        %v508 = vmul.f32 %v506, %v494
        %511 = vrot.lane.b32.xlu0 %v456, 32
        %v512 = vpop.permute.xlu0 %511
        %513 = vrot.lane.b32.xlu0 %v457, 32
        %v514 = vpop.permute.xlu0 %513
        %519 = vrot.lane.b32.xlu0 %v507, 64
        %v520 = vpop.permute.xlu0 %519
        %521 = vrot.lane.b32.xlu0 %v508, 64
        %v522 = vpop.permute.xlu0 %521
        %v525 = vsel %vm412, %v500, %v512
        %v526 = vsel %vm412, %v501, %v514
        %vm527 = vcmask 523264
        %v528 = vsel %vm527, %v525, %v520
        %v529 = vsel %vm527, %v526, %v522
        %v530 = vpack.c.bf16 %v529, %v528
        %v531 = vld [vmem:[%s4] sm:$0xf]
        %v532 = vld [vmem:[%s4 + $0x4] sm:$0xf]
        %v533 = vld [vmem:[%s4 + $0x8] sm:$0xf]
        %v534 = vld [vmem:[%s4 + $0xc] sm:$0xf]
        %v535 = vld [vmem:[%s4 + $0x10] sm:$0xf]
        %v536 = vld [vmem:[%s4 + $0x14] sm:$0xf]
        %v537 = vld [vmem:[%s4 + $0x18] sm:$0xf]
        %v538 = vld [vmem:[%s4 + $0x1c] sm:$0xf]
        %v539 = vld [vmem:[%s4 + $0x20] sm:$0xf]
        %v540 = vld [vmem:[%s4 + $0x24] sm:$0xf]
        %v541 = vld [vmem:[%s4 + $0x28] sm:$0xf]
        %v542 = vld [vmem:[%s4 + $0x2c] sm:$0xf]
        %v543 = vld [vmem:[%s5] sm:$0x1]
        %v545 = vlaneseq
        %v546 = vshrl.u32 %v545, 7
        %v547 = vsub.s32 0, %v546
        %v548 = vrot.slane %v543, %v547
        %v562 = vunpack.c.l.b16 %v531
        %v563 = vunpack.c.l.b16 %v532
        %v564 = vunpack.c.l.b16 %v533
        %v565 = vunpack.c.l.b16 %v534
        %v566 = vunpack.c.l.b16 %v535
        %v567 = vunpack.c.l.b16 %v536
        %v568 = vunpack.c.l.b16 %v537
        %v569 = vunpack.c.l.b16 %v538
        %v570 = vunpack.c.l.b16 %v539
        %v571 = vunpack.c.l.b16 %v540
        %v572 = vunpack.c.l.b16 %v541
        %v573 = vunpack.c.l.b16 %v542
        %v574 = vpack.c.b16 %v563, %v562
        %v575 = vpack.c.b16 %v565, %v564
        %v576 = vpack.c.b16 %v567, %v566
        %v577 = vpack.c.b16 %v569, %v568
        %v578 = vpack.c.b16 %v571, %v570
        %v579 = vpack.c.b16 %v573, %v572
        %vm586 = vcmask 785408
        %v588 = vsel %vm586, %v530, 0
        %590 = vmatprep.subr.bf16.mxu0 0
        %591 = vmatpush1.bf16.msra.mxu0 0
        %592 = vmatprep.subr.bf16.mxu0 0
        %593 = vmatpush1.bf16.msra.mxu0 0
        %594 = vmatprep.subr.bf16.mxu0 0
        %595 = vmatpush1.bf16.msra.mxu0 %v579
        %596 = vmatprep.subr.bf16.mxu0 0
        %597 = vmatpush1.bf16.msra.mxu0 %v578
        %598 = vmatprep.subr.bf16.mxu0 0
        %599 = vmatpush1.bf16.msra.mxu0 %v577
        %600 = vmatprep.subr.bf16.mxu0 0
        %601 = vmatpush1.bf16.msra.mxu0 %v576
        %602 = vmatprep.subr.bf16.mxu0 0
        %603 = vmatpush1.bf16.msra.mxu0 %v575
        %604 = vmatprep.subr.bf16.mxu0 0
        %605 = vmatpush1.bf16.msra.mxu0 %v574
        %606 = vmatprep.subr.bf16.mxu0 0
        %607 = vmatpush2.bf16.msra.mxu0 0
        %608 = vmatprep.subr.bf16.mxu0 0
        %609 = vmatpush2.bf16.msra.mxu0 0
        %610 = vmatprep.subr.bf16.mxu0 0
        %611 = vmatpush2.bf16.msra.mxu0 0
        %612 = vmatprep.subr.bf16.mxu0 0
        %613 = vmatpush2.bf16.msra.mxu0 0
        %614 = vmatprep.subr.bf16.mxu0 0
        %615 = vmatpush2.bf16.msra.mxu0 0
        %616 = vmatprep.subr.bf16.mxu0 0
        %617 = vmatpush2.bf16.msra.mxu0 0
        %618 = vmatprep.subr.bf16.mxu0 0
        %619 = vmatpush2.bf16.msra.mxu0 0
        %620 = vmatprep.subr.bf16.mxu0 0
        %621 = vmatpush2.bf16.msra.mxu0 0
        %622 = vmatprep.mubr.bf16.mxu0 0
        %623 = vmatmul.mubr.bf16.gmra.mxu0 %v588
        %v624 = vpop.f32.mrf.mxu0
        %v625 = vadd.f32 %v548, %v624
        %v626 = vpop.f32.mrf.mxu0
        %v627 = vpop.f32.mrf.mxu0
        %v628 = vadd.f32 %v548, %v627
        %v629 = vpop.f32.mrf.mxu0
        %630 = vdwg.mxu0
        %v631 = vmax.f32 %v625, 0.0
        %v632 = vmax.f32 %v628, 0.0
        %v633 = vrot.slane %v631, 7
        %v634 = vrot.slane %v632, 7
        %v635 = vsel %vm497, %v633, %v634
        %v636 = vsel %vm497, %v634, %v633
        %v637 = vmul.f32 %v636, %v487
        %v638 = vmul.f32 %v635, %v488
        %v639 = vrot.slane %v631, 1
        %v640 = vrot.slane %v632, 1
        %v641 = vsel %vm504, %v639, %v640
        %v642 = vsel %vm504, %v640, %v639
        %v643 = vmul.f32 %v641, %v493
        %v644 = vmul.f32 %v642, %v494
        %647 = vrot.lane.b32.xlu0 %v631, 64
        %v648 = vpop.permute.xlu0 %647
        %649 = vrot.lane.b32.xlu0 %v632, 64
        %v650 = vpop.permute.xlu0 %649
        %v653 = vsel %vm527, %v637, %v648
        %v654 = vsel %vm527, %v638, %v650
        %v655 = vpack.c.bf16 %v654, %v653
        %v656 = vpack.c.bf16 %v644, %v643
        %v657 = vld [vmem:[%s6] sm:$0xf]
        %v658 = vld [vmem:[%s6 + $0x4] sm:$0xf]
        %v659 = vld [vmem:[%s6 + $0x8] sm:$0xf]
        %v660 = vld [vmem:[%s6 + $0xc] sm:$0xf]
        %v661 = vld [vmem:[%s6 + $0x10] sm:$0xf]
        %v662 = vld [vmem:[%s6 + $0x14] sm:$0xf]
        %v663 = vld [vmem:[%s6 + $0x18] sm:$0xf]
        %v664 = vld [vmem:[%s6 + $0x1c] sm:$0xf]
        %v665 = vld [vmem:[%s6 + $0x20] sm:$0xf]
        %v666 = vld [vmem:[%s6 + $0x24] sm:$0xf]
        %v667 = vld [vmem:[%s6 + $0x28] sm:$0xf]
        %v668 = vld [vmem:[%s6 + $0x2c] sm:$0xf]
        %v669 = vld [vmem:[%s6 + $0x30] sm:$0xf]
        %v670 = vld [vmem:[%s6 + $0x34] sm:$0xf]
        %v671 = vld [vmem:[%s6 + $0x38] sm:$0xf]
        %v672 = vld [vmem:[%s6 + $0x3c] sm:$0xf]
        %v673 = vld [vmem:[%s6 + $0x40] sm:$0xf]
        %v674 = vld [vmem:[%s6 + $0x44] sm:$0xf]
        %v675 = vld [vmem:[%s6 + $0x48] sm:$0xf]
        %v676 = vld [vmem:[%s6 + $0x4c] sm:$0xf]
        %v677 = vld [vmem:[%s6 + $0x50] sm:$0xf]
        %v678 = vld [vmem:[%s6 + $0x54] sm:$0xf]
        %v679 = vld [vmem:[%s6 + $0x58] sm:$0xf]
        %v680 = vld [vmem:[%s6 + $0x5c] sm:$0xf]
        %v681 = vld [vmem:[%s7] sm:$0x1]
        %v683 = vlaneseq
        %v684 = vshrl.u32 %v683, 7
        %v685 = vsub.s32 0, %v684
        %v686 = vrot.slane %v681, %v685
        %v712 = vunpack.c.l.b16 %v657
        %v713 = vunpack.c.l.b16 %v658
        %v714 = vunpack.c.l.b16 %v659
        %v715 = vunpack.c.l.b16 %v660
        %v716 = vunpack.c.l.b16 %v661
        %v717 = vunpack.c.l.b16 %v662
        %v718 = vunpack.c.l.b16 %v663
        %v719 = vunpack.c.l.b16 %v664
        %v720 = vunpack.c.l.b16 %v665
        %v721 = vunpack.c.l.b16 %v666
        %v722 = vunpack.c.l.b16 %v667
        %v723 = vunpack.c.l.b16 %v668
        %v724 = vunpack.c.l.b16 %v669
        %v725 = vunpack.c.l.b16 %v670
        %v726 = vunpack.c.l.b16 %v671
        %v727 = vunpack.c.l.b16 %v672
        %v728 = vunpack.c.l.b16 %v673
        %v729 = vunpack.c.l.b16 %v674
        %v730 = vunpack.c.l.b16 %v675
        %v731 = vunpack.c.l.b16 %v676
        %v732 = vunpack.c.l.b16 %v677
        %v733 = vunpack.c.l.b16 %v678
        %v734 = vunpack.c.l.b16 %v679
        %v735 = vunpack.c.l.b16 %v680
        %v736 = vpack.c.b16 %v713, %v712
        %v737 = vpack.c.b16 %v715, %v714
        %v738 = vpack.c.b16 %v717, %v716
        %v739 = vpack.c.b16 %v719, %v718
        %v740 = vpack.c.b16 %v721, %v720
        %v741 = vpack.c.b16 %v723, %v722
        %v742 = vpack.c.b16 %v725, %v724
        %v743 = vpack.c.b16 %v727, %v726
        %v744 = vpack.c.b16 %v729, %v728
        %v745 = vpack.c.b16 %v731, %v730
        %v746 = vpack.c.b16 %v733, %v732
        %v747 = vpack.c.b16 %v735, %v734
        %v761 = vsel %vm527, %v656, 0
        %763 = vmatprep.subr.bf16.mxu0 0
        %764 = vmatpush1.bf16.msra.mxu0 %v743
        %765 = vmatprep.subr.bf16.mxu0 0
        %766 = vmatpush1.bf16.msra.mxu0 %v742
        %767 = vmatprep.subr.bf16.mxu0 0
        %768 = vmatpush1.bf16.msra.mxu0 %v741
        %769 = vmatprep.subr.bf16.mxu0 0
        %770 = vmatpush1.bf16.msra.mxu0 %v740
        %771 = vmatprep.subr.bf16.mxu0 0
        %772 = vmatpush1.bf16.msra.mxu0 %v739
        %773 = vmatprep.subr.bf16.mxu0 0
        %774 = vmatpush1.bf16.msra.mxu0 %v738
        %775 = vmatprep.subr.bf16.mxu0 0
        %776 = vmatpush1.bf16.msra.mxu0 %v737
        %777 = vmatprep.subr.bf16.mxu0 0
        %778 = vmatpush1.bf16.msra.mxu0 %v736
        %779 = vmatprep.subr.bf16.mxu0 0
        %780 = vmatpush2.bf16.msra.mxu0 0
        %781 = vmatprep.subr.bf16.mxu0 0
        %782 = vmatpush2.bf16.msra.mxu0 0
        %783 = vmatprep.subr.bf16.mxu0 0
        %784 = vmatpush2.bf16.msra.mxu0 0
        %785 = vmatprep.subr.bf16.mxu0 0
        %786 = vmatpush2.bf16.msra.mxu0 0
        %787 = vmatprep.subr.bf16.mxu0 0
        %788 = vmatpush2.bf16.msra.mxu0 %v747
        %789 = vmatprep.subr.bf16.mxu0 0
        %790 = vmatpush2.bf16.msra.mxu0 %v746
        %791 = vmatprep.subr.bf16.mxu0 0
        %792 = vmatpush2.bf16.msra.mxu0 %v745
        %793 = vmatprep.subr.bf16.mxu0 0
        %794 = vmatpush2.bf16.msra.mxu0 %v744
        %795 = vmatprep.mubr.bf16.mxu0 %v761
        %796 = vmatmul.mubr.bf16.gmra.mxu0 %v655
        %v797 = vpop.f32.mrf.mxu0
        %v798 = vadd.f32 %v686, %v797
        %v799 = vpop.f32.mrf.mxu0
        %v800 = vpop.f32.mrf.mxu0
        %v801 = vadd.f32 %v686, %v800
        %v802 = vpop.f32.mrf.mxu0
        %803 = vdwg.mxu0
        %v804 = vmax.f32 %v798, 0.0
        %v805 = vmax.f32 %v801, 0.0
        %v806 = vld [vmem:[%s8] sm:$0x1]
        %v808 = vlaneseq
        %v809 = vshrl.u32 %v808, 7
        %v810 = vsub.s32 0, %v809
        %v811 = vrot.slane %v806, %v810
        %v813 = vmul.f32 %v804, %v811
        %v814 = vmul.f32 %v805, %v811
        %v815 = vsel %vm527, %v813, 0.0
        %816 = vadd.xlane.f32.xlu0 %v815
        %v817 = vpop.xlane.xlu0 %816
        %v818 = vsel %vm527, %v814, 0.0
        %819 = vadd.xlane.f32.xlu0 %v818
        %v820 = vpop.xlane.xlu0 %819
        %s821 = sld [smem:[#allocation2]]
        %v822 = vstv %s821
        %v823 = vadd.f32 %v817, %v822
        %v824 = vadd.f32 %v820, %v822
        %v825 = vld [vmem:[%s408] sm:$0x1]
        %vm826 = vcmp.ne.s32.totalorder %v825, 0
        %v829 = vlaneseq
        %v830 = vshrl.u32 %v829, 7
        %v831 = vsub.s32 0, %v830
        %v832 = vrot.slane %v823, %v831
        %v833 = vlaneseq
        %v834 = vshrl.u32 %v833, 7
        %v835 = vsub.s32 1, %v834
        %v836 = vrot.slane %v823, %v835
        %v837 = vlaneseq
        %v838 = vshrl.u32 %v837, 7
        %v839 = vsub.s32 2, %v838
        %v840 = vrot.slane %v823, %v839
        %v841 = vlaneseq
        %v842 = vshrl.u32 %v841, 7
        %v843 = vsub.s32 3, %v842
        %v844 = vrot.slane %v823, %v843
        %v845 = vlaneseq
        %v846 = vshrl.u32 %v845, 7
        %v847 = vsub.s32 4, %v846
        %v848 = vrot.slane %v823, %v847
        %v849 = vlaneseq
        %v850 = vshrl.u32 %v849, 7
        %v851 = vsub.s32 5, %v850
        %v852 = vrot.slane %v823, %v851
        %v853 = vlaneseq
        %v854 = vshrl.u32 %v853, 7
        %v855 = vsub.s32 6, %v854
        %v856 = vrot.slane %v823, %v855
        %v857 = vlaneseq
        %v858 = vshrl.u32 %v857, 7
        %v859 = vsub.s32 7, %v858
        %v860 = vrot.slane %v823, %v859
        %v861 = vlaneseq
        %v862 = vshrl.u32 %v861, 7
        %v863 = vsub.s32 0, %v862
        %v864 = vrot.slane %v824, %v863
        %v865 = vlaneseq
        %v866 = vshrl.u32 %v865, 7
        %v867 = vsub.s32 1, %v866
        %v868 = vrot.slane %v824, %v867
        %v869 = vlaneseq
        %v870 = vshrl.u32 %v869, 7
        %v871 = vsub.s32 2, %v870
        %v872 = vrot.slane %v824, %v871
        %v873 = vlaneseq
        %v874 = vshrl.u32 %v873, 7
        %v875 = vsub.s32 3, %v874
        %v876 = vrot.slane %v824, %v875
        %v877 = vlaneseq
        %v878 = vshrl.u32 %v877, 7
        %v879 = vsub.s32 4, %v878
        %v880 = vrot.slane %v824, %v879
        %v881 = vlaneseq
        %v882 = vshrl.u32 %v881, 7
        %v883 = vsub.s32 5, %v882
        %v884 = vrot.slane %v824, %v883
        %v885 = vlaneseq
        %v886 = vshrl.u32 %v885, 7
        %v887 = vsub.s32 6, %v886
        %v888 = vrot.slane %v824, %v887
        %v889 = vlaneseq
        %v890 = vshrl.u32 %v889, 7
        %v891 = vsub.s32 7, %v890
        %v892 = vrot.slane %v824, %v891
        %v893 = vcombine.low %v832, %v836
        %v894 = vcombine.low %v840, %v844
        %v895 = vcombine.low %v848, %v852
        %v896 = vcombine.low %v856, %v860
        %v898 = vunpack.c.l.s4 1966171168
        %v899 = vunpack.c.0.s8 %v898
        %v900 = vlaneseq
        %v901 = vshrl.u32 %v900, 7
        %v902 = vsub.s32 %v899, %v901
        %v903 = vrot.slane %v893, %v902
        %v905 = vunpack.c.l.s4 1966171168
        %v906 = vunpack.c.0.s8 %v905
        %v907 = vlaneseq
        %v908 = vshrl.u32 %v907, 7
        %v909 = vsub.s32 %v906, %v908
        %v910 = vrot.slane %v894, %v909
        %v912 = vunpack.c.l.s4 1966171168
        %v913 = vunpack.c.0.s8 %v912
        %v914 = vlaneseq
        %v915 = vshrl.u32 %v914, 7
        %v916 = vsub.s32 %v913, %v915
        %v917 = vrot.slane %v895, %v916
        %v919 = vunpack.c.l.s4 1966171168
        %v920 = vunpack.c.0.s8 %v919
        %v921 = vlaneseq
        %v922 = vshrl.u32 %v921, 7
        %v923 = vsub.s32 %v920, %v922
        %v924 = vrot.slane %v896, %v923
        %v925 = vcombine.low %v903, %v910
        %v926 = vcombine.low %v917, %v924
        %v928 = vunpack.c.l.s4 1966171168
        %v929 = vunpack.c.0.s8 %v928
        %v930 = vlaneseq
        %v931 = vshrl.u32 %v930, 7
        %v932 = vsub.s32 %v929, %v931
        %v933 = vrot.slane %v925, %v932
        %v935 = vunpack.c.l.s4 1966171168
        %v936 = vunpack.c.0.s8 %v935
        %v937 = vlaneseq
        %v938 = vshrl.u32 %v937, 7
        %v939 = vsub.s32 %v936, %v938
        %v940 = vrot.slane %v926, %v939
        %v941 = vcombine.low %v933, %v940
        %v942 = vcombine.low %v864, %v868
        %v943 = vcombine.low %v872, %v876
        %v944 = vcombine.low %v880, %v884
        %v945 = vcombine.low %v888, %v892
        %v947 = vunpack.c.l.s4 1966171168
        %v948 = vunpack.c.0.s8 %v947
        %v949 = vlaneseq
        %v950 = vshrl.u32 %v949, 7
        %v951 = vsub.s32 %v948, %v950
        %v952 = vrot.slane %v942, %v951
        %v954 = vunpack.c.l.s4 1966171168
        %v955 = vunpack.c.0.s8 %v954
        %v956 = vlaneseq
        %v957 = vshrl.u32 %v956, 7
        %v958 = vsub.s32 %v955, %v957
        %v959 = vrot.slane %v943, %v958
        %v961 = vunpack.c.l.s4 1966171168
        %v962 = vunpack.c.0.s8 %v961
        %v963 = vlaneseq
        %v964 = vshrl.u32 %v963, 7
        %v965 = vsub.s32 %v962, %v964
        %v966 = vrot.slane %v944, %v965
        %v968 = vunpack.c.l.s4 1966171168
        %v969 = vunpack.c.0.s8 %v968
        %v970 = vlaneseq
        %v971 = vshrl.u32 %v970, 7
        %v972 = vsub.s32 %v969, %v971
        %v973 = vrot.slane %v945, %v972
        %v974 = vcombine.low %v952, %v959
        %v975 = vcombine.low %v966, %v973
        %v977 = vunpack.c.l.s4 1966171168
        %v978 = vunpack.c.0.s8 %v977
        %v979 = vlaneseq
        %v980 = vshrl.u32 %v979, 7
        %v981 = vsub.s32 %v978, %v980
        %v982 = vrot.slane %v974, %v981
        %v984 = vunpack.c.l.s4 1966171168
        %v985 = vunpack.c.0.s8 %v984
        %v986 = vlaneseq
        %v987 = vshrl.u32 %v986, 7
        %v988 = vsub.s32 %v985, %v987
        %v989 = vrot.slane %v975, %v988
        %v990 = vcombine.low %v982, %v989
        %991 = vset.pattern.permute.xlu0 0
        %992 = vperm.xlu0 %991, %v941
        %v993 = vpop.permute.xlu0 %992
        %994 = vset.pattern.permute.xlu0 0
        %995 = vperm.xlu0 %994, %v990
        %v996 = vpop.permute.xlu0 %995
        %v997 = vlaneseq
        %v998 = vand.u32 %v997, 127
        %v999 = vlaneseq
        %v1000 = vshrl.u32 %v999, 7
        %v1001 = vsub.s32 %v998, %v1000
        %v1002 = vrot.slane %v993, %v1001
        %v1003 = vadd.s32 %v998, 4294967288
        %v1004 = vlaneseq
        %v1005 = vshrl.u32 %v1004, 7
        %v1006 = vsub.s32 %v1003, %v1005
        %v1007 = vrot.slane %v996, %v1006
        %vm1008 = vcmask 130112
        %v1009 = vsel %vm1008, %v1007, %v1002
        %v1011 = vunpack.c.l.s4 1966171168
        %v1012 = vunpack.c.0.s8 %v1011
        %v1013 = vlaneseq
        %v1014 = vshrl.u32 %v1013, 7
        %v1015 = vsub.s32 %v1012, %v1014
        %v1016 = vrot.slane %v1009, %v1015
        %v1018 = vunpack.c.l.s4 1966171168
        %v1019 = vunpack.c.0.s8 %v1018
        %v1020 = vlaneseq
        %v1021 = vshrl.u32 %v1020, 7
        %v1022 = vsub.s32 %v1019, %v1021
        %v1023 = vrot.slane %v1016, %v1022
        %v1025 = vsel %vm826, 0.0, %v1023
        %vm1026 = vcmask 122880
        %1027 = vst.msk [vmem:[%s394] sm:$0x1] %vm1026, %v1025
        %v1030 = vlaneseq
        %v1031 = vshrl.u32 %v1030, 7
        %v1032 = vsub.s32 %v998, %v1031
        %v1033 = vrot.slane %v472, %v1032
        %v1034 = vlaneseq
        %v1035 = vshrl.u32 %v1034, 7
        %v1036 = vsub.s32 %v1003, %v1035
        %v1037 = vrot.slane %v479, %v1036
        %v1038 = vsel %vm1008, %v1037, %v1033
        %1040 = vst.msk [vmem:[%s400] sm:$0x1] %vm1026, %v1038
        %s1041 = sand.u32 %s258, 1
        %s1042 = scalar_lea.sflag [#allocation4], %s1041
        %s1043 = sand.u32 %s258, 1
        %s1044 = scalar_lea.vmem [#allocation3], %s1043
        %s1045 = sand.u32 %s284, 1
        %s1046 = scalar_lea.sflag [#allocation6], %s1045
        %s1047 = sand.u32 %s284, 1
        %s1048 = scalar_lea.vmem [#allocation5], %s1047
        // Predicated region
        $region61: #{tpu_custom_call.1} parent=59 // pred_check
          %p1049 = pneg %p268
        $region62: #{tpu_custom_call.1} parent=59 // pred_check_branch
          %1051 = sbr.rel (%p1049) target = $region64
        $region63: #{tpu_custom_call.1} parent=59 // pred_region
          %s1053 = ssub.s32 16, 16
          %1054 = vsyncadd %s1042, %s1053
          %s1055 = smul.addr %s30, 16
          %s1056 = scalar_lea.hbm %s10, %s1055
          %s1058 = sshll.u32 %s1044, 4
          %s1059 = int_to_ptr.vmem [resolvable:$true] %s1058
          %1061 = dma.vmem_to_hbm [thread:$0]  %s1059, 16, %s1056, %s1042
        $region64: #{tpu_custom_call.1} parent=59 // pred_fallthru
          _
        // Predicated region
        $region65: #{tpu_custom_call.1} parent=59 // pred_check
          %p1062 = pneg %p294
        $region66: #{tpu_custom_call.1} parent=59 // pred_check_branch
          %1064 = sbr.rel (%p1062) target = $region68
        $region67: #{tpu_custom_call.1} parent=59 // pred_region
          %s1066 = ssub.s32 16, 16
          %1067 = vsyncadd %s1046, %s1066
          %s1068 = smul.addr %s30, 16
          %s1069 = scalar_lea.hbm %s11, %s1068
          %s1071 = sshll.u32 %s1048, 4
          %s1072 = int_to_ptr.vmem [resolvable:$true] %s1071
          %1074 = dma.vmem_to_hbm [thread:$0]  %s1072, 16, %s1069, %s1046
        $region68: #{tpu_custom_call.1} parent=59 // pred_fallthru
          _
      $region60: #{tpu_custom_call.1} parent=5 // pred_fallthru
        _
      %p1075 = scmp.le.s32.totalorder 2, %s25
      // Predicated region
      $region69: #{tpu_custom_call.1} parent=5 // pred_check
        %p1076 = pneg %p1075
      $region70: #{tpu_custom_call.1} parent=5 // pred_check_branch
        %1078 = sbr.rel (%p1076) target = $region72
      $region71: #{tpu_custom_call.1} parent=5 // pred_region
        %s1079 = ssub.s32 %s25, 2
        // Predicated region
        $region73: #{tpu_custom_call.1} parent=71 // pred_check
          %p1080 = pneg %p274
        $region74: #{tpu_custom_call.1} parent=71 // pred_check_branch
          %1082 = sbr.rel (%p1080) target = $region76
        $region75: #{tpu_custom_call.1} parent=71 // pred_region
          %s1083 = sand.u32 %s259, 1
          %s1084 = scalar_lea.sflag [#allocation4], %s1083
          %s1085 = sand.u32 %s259, 1
          %s1086 = scalar_lea.vmem [#allocation3], %s1085
          %1087 = dma.done %s1084, 16
        $region76: #{tpu_custom_call.1} parent=71 // pred_fallthru
          _
        // Predicated region
        $region77: #{tpu_custom_call.1} parent=71 // pred_check
          %p1088 = pneg %p300
        $region78: #{tpu_custom_call.1} parent=71 // pred_check_branch
          %1090 = sbr.rel (%p1088) target = $region80
        $region79: #{tpu_custom_call.1} parent=71 // pred_region
          %s1091 = sand.u32 %s285, 1
          %s1092 = scalar_lea.sflag [#allocation6], %s1091
          %s1093 = sand.u32 %s285, 1
          %s1094 = scalar_lea.vmem [#allocation5], %s1093
          %1095 = dma.done %s1092, 16
        $region80: #{tpu_custom_call.1} parent=71 // pred_fallthru
          _
      $region72: #{tpu_custom_call.1} parent=5 // pred_fallthru
        _
    $region6: #{tpu_custom_call.1} parent=1 // loop_footer
      %s29 = sadd.s32 1, %s25
    $region7: #{tpu_custom_call.1} parent=1 // loop_footer_branch
      %24 = sbr.rel target = $region3
    $region8: #{tpu_custom_call.1} parent=1 // loop_exit
      _
    %1096 = vsyncpa [#allocation4], 1
    %s1097 = scalar_lea.sflag [#allocation4], 1
    %1098 = vsyncpa %s1097, 1
    %1099 = vsyncpa [#allocation6], 1
    %s1100 = scalar_lea.sflag [#allocation6], 1
    %1101 = vsyncpa %s1100, 1

</llo_original>
